<compile_context>
chip_gen: v6e
topology: v6e:2x2x1
jax: 0.10.0
libtpu: 0.0.40
codegen_flags: <defaults>
</compile_context>

<pallas_src>
import functools

import jax
import jax.numpy as jnp
from jax.experimental import pallas as pl
from jax.experimental.pallas import tpu as pltpu


def _round_up(x: int, m: int) -> int:
    return ((x + m - 1) // m) * m


def mlp_agent_kernel(x_ref, w1_ref, w2_ref, w3_ref, o_ref):
    """Fused 3-layer MLP with squared activations; one batch tile per grid step."""
    # Layer 1: stream-dtype x stream-dtype -> f32 on the MXU; square in f32 (VPU).
    x = x_ref[...].astype(w1_ref.dtype)          # no-op when dtypes already match
    h1 = jnp.dot(x, w1_ref[...], preferred_element_type=jnp.float32)
    h1 = h1 * h1

    # Layers 2/3: cast the f32 activations down to the weight dtype so the MXU
    # sees bf16 x bf16 (f32 x f32 matmuls run at a fraction of the bf16 rate);
    # accumulation stays f32 via preferred_element_type.
    h2 = jnp.dot(h1.astype(w2_ref.dtype), w2_ref[...],
                 preferred_element_type=jnp.float32)
    h2 = h2 * h2

    out = jnp.dot(h2.astype(w3_ref.dtype), w3_ref[...],
                  preferred_element_type=jnp.float32)
    o_ref[...] = out.astype(o_ref.dtype)


def prepare_params(w1, w2, w3, dtype=jnp.bfloat16):
    """One-time weight prep (cast to the MXU stream dtype) so the per-call cast
    inside mlp_agent_forward becomes a no-op."""
    return w1.astype(dtype), w2.astype(dtype), w3.astype(dtype)


@functools.partial(
    jax.jit,
    static_argnames=("tile_b", "stream_dtype", "out_dtype", "min_pallas_batch"))
def mlp_agent_forward(inputs, w1, w2, w3, *, tile_b=2048,
                      stream_dtype=jnp.bfloat16, out_dtype=None,
                      min_pallas_batch=0):
    """MLPAgent forward: actions = ((inputs@W1)^2 @ W2)^2 @ W3.

    inputs: [B, input_shape]; w1: [input_shape, H]; w2: [H, H]; w3: [H, n_actions]
    (weights already stored as [in, out], i.e. transposed vs torch Linear.weight).
    """
    B, in_dim = inputs.shape
    H = w1.shape[1]
    n_actions = w3.shape[1]
    out_dtype = inputs.dtype if out_dtype is None else out_dtype
    sd = stream_dtype

    w1_s, w2_s, w3_s = (w.astype(sd) for w in (w1, w2, w3))  # no-op if prepared

    if B < min_pallas_batch:
        # Tiny batches: one grid step's fixed cost dwarfs the math; use a plain
        # fused-XLA path with the same numerics class (bf16 operands, f32 acc).
        h1 = jnp.square(jnp.dot(inputs.astype(sd), w1_s,
                                preferred_element_type=jnp.float32))
        h2 = jnp.square(jnp.dot(h1.astype(sd), w2_s,
                                preferred_element_type=jnp.float32))
        out = jnp.dot(h2.astype(sd), w3_s, preferred_element_type=jnp.float32)
        return out.astype(out_dtype)

    # Batch tile: explicit, multiple of 16 sublanes, never larger than the
    # rounded-up batch.  Only the batch axis is padded; feature axes stay at
    # their true sizes and are used as full-extent BlockSpec dims.
    SUB = 16
    tile_b = max(SUB, _round_up(min(tile_b, B), SUB))
    B_p = _round_up(B, tile_b)

    x = inputs.astype(sd)
    if B_p != B:
        # Zero rows produce zero outputs and are sliced off below.
        x = jnp.pad(x, ((0, B_p - B), (0, 0)))

    grid = (B_p // tile_b,)
    out = pl.pallas_call(
        mlp_agent_kernel,
        out_shape=jax.ShapeDtypeStruct((B_p, n_actions), out_dtype),
        grid_spec=pltpu.PrefetchScalarGridSpec(
            num_scalar_prefetch=0,
            grid=grid,
            in_specs=[
                pl.BlockSpec((tile_b, in_dim), lambda i: (i, 0)),   # streamed x tile
                pl.BlockSpec((in_dim, H), lambda i: (0, 0)),        # W1 (resident)
                pl.BlockSpec((H, H), lambda i: (0, 0)),             # W2 (resident)
                pl.BlockSpec((H, n_actions), lambda i: (0, 0)),     # W3 (resident)
            ],
            out_specs=pl.BlockSpec((tile_b, n_actions), lambda i: (i, 0)),
        ),
        compiler_params=pltpu.CompilerParams(
            # Independent batch tiles: shardable across v7x's two TensorCores.
            dimension_semantics=("parallel",),
            # Let XLA fuse the pad / bf16-cast of x into the kernel's input DMA
            # instead of materializing a padded copy in HBM first.
            allow_input_fusion=[True, False, False, False],
        ),
    )(x, w1_s, w2_s, w3_s)

    # Strip batch padding only; feature axes were never padded.
    return out[:B]


if __name__ == "__main__":
    # Small shapes consistent with the module: a batch of agent observations.
    batch = 8
    input_shape = 32        # obs dim
    rnn_hidden_dim = 32     # args.rnn_hidden_dim
    n_actions = 8           # args.n_actions

    key = jax.random.PRNGKey(0)
    k_x, k1, k2, k3 = jax.random.split(key, 4)

    x = jax.random.normal(k_x, (batch, input_shape), dtype=jnp.float32)
    # torch stores Linear.weight as [out, in]; we keep the transposed [in, out].
    w1 = jax.random.normal(k1, (input_shape, rnn_hidden_dim), dtype=jnp.float32) * 0.1
    w2 = jax.random.normal(k2, (rnn_hidden_dim, rnn_hidden_dim), dtype=jnp.float32) * 0.1
    w3 = jax.random.normal(k3, (rnn_hidden_dim, n_actions), dtype=jnp.float32) * 0.1

    hi = jax.lax.Precision.HIGHEST

    # Pure-JAX f32 reference (matches the torch module exactly).
    h1 = jnp.square(jnp.matmul(x, w1, precision=hi))
    h2 = jnp.square(jnp.matmul(h1, w2, precision=hi))
    ref = jnp.matmul(h2, w3, precision=hi)

    # 1) Full-f32 streaming path through the Pallas kernel: tight check.
    out_f32 = jax.block_until_ready(
        mlp_agent_forward(x, w1, w2, w3,
                          stream_dtype=jnp.float32, out_dtype=jnp.float32))
    assert out_f32.shape == (batch, n_actions)
    assert jnp.allclose(out_f32, ref, rtol=1e-5, atol=1e-5)

    # 2) Default bf16-streamed path (weights prepared once).  Reference applies
    #    the same bf16 operand rounding the kernel uses; note two squarings
    #    amplify bf16 rounding, so true-f32 deviation can exceed this tolerance
    #    (acceptable for RL action logits, argmax ties may flip).
    bf = lambda t: t.astype(jnp.bfloat16).astype(jnp.float32)
    w1_b, w2_b, w3_b = prepare_params(w1, w2, w3)
    out_bf = jax.block_until_ready(mlp_agent_forward(x, w1_b, w2_b, w3_b))
    h1b = jnp.square(jnp.matmul(bf(x), bf(w1), precision=hi))
    h2b = jnp.square(jnp.matmul(bf(h1b), bf(w2), precision=hi))
    ref_bf = jnp.matmul(bf(h2b), bf(w3), precision=hi)
    assert out_bf.shape == (batch, n_actions)
    assert out_bf.dtype == jnp.float32
    assert jnp.allclose(out_bf, ref_bf, rtol=2e-2, atol=2e-2)

    # 3) Multi-tile grid + bf16 output: exercises the batch pipeline.
    B2 = 2048
    x2 = jax.random.normal(jax.random.PRNGKey(1), (B2, input_shape), jnp.float32)
    out2 = jax.block_until_ready(
        mlp_agent_forward(x2, w1_b, w2_b, w3_b, tile_b=512,
                          out_dtype=jnp.bfloat16))
    h1c = jnp.square(jnp.matmul(bf(x2), bf(w1), precision=hi))
    h2c = jnp.square(jnp.matmul(bf(h1c), bf(w2), precision=hi))
    ref2 = jnp.matmul(bf(h2c), bf(w3), precision=hi)
    assert out2.shape == (B2, n_actions) and out2.dtype == jnp.bfloat16
    assert jnp.allclose(out2.astype(jnp.float32), ref2, rtol=3e-2, atol=3e-2)

    # 4) Tiny-batch dispatch to the plain XLA path (same numerics class).
    out_small = jax.block_until_ready(
        mlp_agent_forward(x, w1_b, w2_b, w3_b, min_pallas_batch=64))
    assert jnp.allclose(out_small, ref_bf, rtol=2e-2, atol=2e-2)

    print("KERNEL_OK")
</pallas_src>

<mosaic_0001>
module attributes {stable_mosaic.version = 11 : i64} {
  func.func @mlp_agent_kernel(%arg0: i32, %arg1: memref<16x32xf32, #tpu.memory_space<vmem>>, %arg2: memref<32x32xf32, #tpu.memory_space<vmem>>, %arg3: memref<32x32xf32, #tpu.memory_space<vmem>>, %arg4: memref<32x8xf32, #tpu.memory_space<vmem>>, %arg5: memref<16x8xf32, #tpu.memory_space<vmem>>) attributes {dimension_semantics = [#tpu.dimension_semantics<parallel>], iteration_bounds = array<i64: 1>, scalar_prefetch = 0 : i64, scratch_operands = 0 : i64, tpu.core_type = #tpu.core_type<tc>, window_params = [{transform_indices = @transform_0, window_bounds = array<i64: 16, 32>}, {pipeline_mode = #tpu.pipeline_mode<synchronous>, transform_indices = @transform_1, window_bounds = array<i64: 32, 32>}, {pipeline_mode = #tpu.pipeline_mode<synchronous>, transform_indices = @transform_2, window_bounds = array<i64: 32, 32>}, {pipeline_mode = #tpu.pipeline_mode<synchronous>, transform_indices = @transform_3, window_bounds = array<i64: 32, 8>}, {transform_indices = @transform_4, window_bounds = array<i64: 16, 8>}]} {
    %c0 = arith.constant 0 : index
    %c0_0 = arith.constant 0 : index
    %0 = vector.load %arg1[%c0, %c0_0] : memref<16x32xf32, #tpu.memory_space<vmem>>, vector<16x32xf32>
    %c0_1 = arith.constant 0 : index
    %c0_2 = arith.constant 0 : index
    %1 = vector.load %arg2[%c0_1, %c0_2] : memref<32x32xf32, #tpu.memory_space<vmem>>, vector<32x32xf32>
    %cst = arith.constant dense<0.000000e+00> : vector<16x32xf32>
    %2 = tpu.matmul %0, %1, %cst {dimension_numbers = #tpu.dot_dimension_numbers<[1], [0], [0], [1], [0, 0, 1, 1], [], []>} : vector<16x32xf32>, vector<32x32xf32>, vector<16x32xf32> -> vector<16x32xf32>
    %3 = arith.mulf %2, %2 : vector<16x32xf32>
    %c0_3 = arith.constant 0 : index
    %c0_4 = arith.constant 0 : index
    %4 = vector.load %arg3[%c0_3, %c0_4] : memref<32x32xf32, #tpu.memory_space<vmem>>, vector<32x32xf32>
    %cst_5 = arith.constant dense<0.000000e+00> : vector<16x32xf32>
    %5 = tpu.matmul %3, %4, %cst_5 {dimension_numbers = #tpu.dot_dimension_numbers<[1], [0], [0], [1], [0, 0, 1, 1], [], []>} : vector<16x32xf32>, vector<32x32xf32>, vector<16x32xf32> -> vector<16x32xf32>
    %6 = arith.mulf %5, %5 : vector<16x32xf32>
    %c0_6 = arith.constant 0 : index
    %c0_7 = arith.constant 0 : index
    %7 = vector.load %arg4[%c0_6, %c0_7] : memref<32x8xf32, #tpu.memory_space<vmem>>, vector<32x8xf32>
    %cst_8 = arith.constant dense<0.000000e+00> : vector<16x8xf32>
    %8 = tpu.matmul %6, %7, %cst_8 {dimension_numbers = #tpu.dot_dimension_numbers<[1], [0], [0], [1], [0, 0, 1, 1], [], []>} : vector<16x32xf32>, vector<32x8xf32>, vector<16x8xf32> -> vector<16x8xf32>
    %c0_9 = arith.constant 0 : index
    %c0_10 = arith.constant 0 : index
    %9 = vector.load %arg5[%c0_9, %c0_10] : memref<16x8xf32, #tpu.memory_space<vmem>>, vector<16x8xf32>
    tpu.vector_store %arg5[%c0_9, %c0_10], %8 {strides = array<i32>} : memref<16x8xf32, #tpu.memory_space<vmem>>, vector<16x8xf32>,
    return
  }
  func.func @transform_0(%arg0: i32) -> (i32, i32) {
    %c0_i32 = arith.constant 0 : i32
    %c0_i32_0 = arith.constant 0 : i32
    return %arg0, %c0_i32 : i32, i32
  }
  func.func @transform_1(%arg0: i32) -> (i32, i32) {
    %c0_i32 = arith.constant 0 : i32
    %c0_i32_0 = arith.constant 0 : i32
    %c0_i32_1 = arith.constant 0 : i32
    return %c0_i32, %c0_i32_0 : i32, i32
  }
  func.func @transform_2(%arg0: i32) -> (i32, i32) {
    %c0_i32 = arith.constant 0 : i32
    %c0_i32_0 = arith.constant 0 : i32
    %c0_i32_1 = arith.constant 0 : i32
    return %c0_i32, %c0_i32_0 : i32, i32
  }
  func.func @transform_3(%arg0: i32) -> (i32, i32) {
    %c0_i32 = arith.constant 0 : i32
    %c0_i32_0 = arith.constant 0 : i32
    %c0_i32_1 = arith.constant 0 : i32
    return %c0_i32, %c0_i32_0 : i32, i32
  }
  func.func @transform_4(%arg0: i32) -> (i32, i32) {
    %c0_i32 = arith.constant 0 : i32
    %c0_i32_0 = arith.constant 0 : i32
    return %arg0, %c0_i32 : i32, i32
  }
}

</mosaic_0001>

<llo_original>
// kernel: mlp_agent_forward.2
$region0: #{mlp_agent_forward.2}
  #allocation0 [shape = 'u32[]', space=smem, size = 0x4, offset = 0x4, fixed_abs, tag = 'smem constant byte address 0x4 - core index']
  #allocation1 [shape = 'u32[144,128]{1,0:T(1,128)}', space=vmem, size = 0x12000, scoped, tag = 'internal scratch']
  #allocation2 [shape = 'u32[2048]{0}', space=vmem, size = 0x2000, scoped, tag = 'scoped memory for mlp_agent_forward.2']
  #allocation3 [shape = 'u32[2048]{0}', space=vmem, size = 0x2000, scoped, tag = 'scoped memory for mlp_agent_forward.2']
  #allocation4 [shape = 'u32[2048]{0}', space=vmem, size = 0x2000, scoped, tag = 'scoped memory for mlp_agent_forward.2']
  #allocation5 [shape = 'u32[2048]{0}', space=vmem, size = 0x2000, scoped, tag = 'scoped memory for mlp_agent_forward.2']
  #allocation6 [shape = 'u32[2048]{0}', space=vmem, size = 0x2000, scoped, tag = 'scoped memory for mlp_agent_forward.2']
  %s0 = inlined_call_operand.vmem [shape: f32[32,32], index: 0, kind: input, shape index: {}]
  %s1 = inlined_call_operand.hbm [shape: f32[32,32], index: 1, kind: input, shape index: {}]
  %s2 = inlined_call_operand.vmem [shape: f32[32,8], index: 2, kind: input, shape index: {}]
  %s3 = inlined_call_operand.vmem [shape: f32[8,32], index: 3, kind: input, shape index: {}]
  %s4 = inlined_call_operand.<no memory space> [shape: f32[], index: 4, kind: input, shape index: {}]
  %s5 = inlined_call_operand.vmem [shape: f32[16,8], index: 5, kind: output, shape index: {}]
  %s6 = sld [smem:[#allocation0]]
  $region30: #{mlp_agent_forward.2} parent=0
    _
  %s8 = ssub.s32 1, %s6
  %s9 = scalar_select 0, %s8, %s6
  %v10 = vstv %s4
  $region1: #{mlp_agent_forward.2} parent=0
    #allocation7 [shape = 'u8[16384]{0}', space=vmem, size = 0x4000, scoped, tag = 'input window, operand 2, single buffered']
    #allocation8 [shape = 's32[1]{0}', space=sflag, size = 0x4, scoped, tag = 'scoped memory for mlp_agent_forward.2']
    #allocation9 [shape = 'u8[8192]{0}', space=vmem, size = 0x2000, dematerialized = true, scoped, tag = 'FusionAdapter Buffer %fusion.1 = f32[16,32]{1,0:T(8,128)} fusion(%param_3.1, %param_4), kind=kLoop, calls=%fused_computation.1.clone, metadata={op_name="jit(mlp_agent_forward)/jit(_pad)/pad" stack_frame_id=1}']
    %11 = vsyncpa [#allocation8], 0
    // Predicated region
    $region2: #{mlp_agent_forward.2} parent=1 // pred_check
      _
    $region3: #{mlp_agent_forward.2} parent=1 // pred_check_branch
      %13 = sbr.rel (0) target = $region5
    $region4: #{mlp_agent_forward.2} parent=1 // pred_region
      _
    $region5: #{mlp_agent_forward.2} parent=1 // pred_fallthru
      _
    // Predicated region
    $region6: #{mlp_agent_forward.2} parent=1 // pred_check
      _
    $region7: #{mlp_agent_forward.2} parent=1 // pred_check_branch
      %15 = sbr.rel (0) target = $region9
    $region8: #{mlp_agent_forward.2} parent=1 // pred_region
      _
    $region9: #{mlp_agent_forward.2} parent=1 // pred_fallthru
      _
    // Predicated region
    $region10: #{mlp_agent_forward.2} parent=1 // pred_check
      _
    $region11: #{mlp_agent_forward.2} parent=1 // pred_check_branch
      %17 = sbr.rel (0) target = $region13
    $region12: #{mlp_agent_forward.2} parent=1 // pred_region
      %s19 = ssub.s32 512, 512
      %20 = vsyncadd [#allocation8], %s19
      %s21 = sshll.u32 [#allocation7], 4
      %s22 = int_to_ptr.vmem [resolvable:$true] %s21
      %27 = dma.hbm_to_vmem [thread:$0]  %s1, 512, %s22, [#allocation8], 128, 128, 8
    $region13: #{mlp_agent_forward.2} parent=1 // pred_fallthru
      _
    // Predicated region
    $region14: #{mlp_agent_forward.2} parent=1 // pred_check
      _
    $region15: #{mlp_agent_forward.2} parent=1 // pred_check_branch
      %29 = sbr.rel (0) target = $region17
    $region16: #{mlp_agent_forward.2} parent=1 // pred_region
      _
    $region17: #{mlp_agent_forward.2} parent=1 // pred_fallthru
      _
    // Predicated region
    $region18: #{mlp_agent_forward.2} parent=1 // pred_check
      _
    $region19: #{mlp_agent_forward.2} parent=1 // pred_check_branch
      %31 = sbr.rel (0) target = $region21
    $region20: #{mlp_agent_forward.2} parent=1 // pred_region
      %32 = dma.done [#allocation8], 512
    $region21: #{mlp_agent_forward.2} parent=1 // pred_fallthru
      _
    %v33 = vld [vmem:[%s3] sm:$0xff]
    %v34 = vlaneseq
    %v35 = vand.u32 %v34, 127
    %vm37 = vcmp.lt.s32.totalorder %v35, 32
    %v38 = vsel %vm37, %v33, %v10
    %s40 = ssub.s32 256, 1
    %41 = vst [vmem:[#allocation9] sm:%s40] %v38
    %s42 = scalar_lea.vmem [#allocation9], 8
    %s44 = ssub.s32 256, 1
    %45 = vst [vmem:[%s42] sm:%s44] %v10
    %v46 = vld [vmem:[#allocation9] sm:$0xff]
    %v47 = vld [vmem:[#allocation9 + $0x8] sm:$0xff]
    %v48 = vld [vmem:[%s0] sm:$0xff]
    %v49 = vld [vmem:[%s0 + $0x8] sm:$0xff]
    %v50 = vld [vmem:[%s0 + $0x10] sm:$0xff]
    %v51 = vld [vmem:[%s0 + $0x18] sm:$0xff]
    %vm52 = vcmask 261120
    %v54 = vsel %vm52, %v46, 0
    %v57 = vsel %vm52, %v47, 0
    %59 = vmatprep.subr.mxu0 0.0
    %60 = vmatpush1.msra.mxu0 0.0
    %61 = vmatprep.subr.mxu0 0.0
    %62 = vmatpush1.msra.mxu0 0.0
    %63 = vmatprep.subr.mxu0 0.0
    %64 = vmatpush1.msra.mxu0 0.0
    %65 = vmatprep.subr.mxu0 0.0
    %66 = vmatpush1.msra.mxu0 0.0
    %67 = vmatprep.subr.mxu0 0.0
    %68 = vmatpush1.msra.mxu0 0.0
    %69 = vmatprep.subr.mxu0 0.0
    %70 = vmatpush1.msra.mxu0 0.0
    %71 = vmatprep.subr.mxu0 0.0
    %72 = vmatpush1.msra.mxu0 0.0
    %73 = vmatprep.subr.mxu0 0.0
    %74 = vmatpush1.msra.mxu0 0.0
    %75 = vmatprep.subr.mxu0 0.0
    %76 = vmatpush1.msra.mxu0 0.0
    %77 = vmatprep.subr.mxu0 0.0
    %78 = vmatpush1.msra.mxu0 0.0
    %79 = vmatprep.subr.mxu0 0.0
    %80 = vmatpush1.msra.mxu0 0.0
    %81 = vmatprep.subr.mxu0 0.0
    %82 = vmatpush1.msra.mxu0 0.0
    %83 = vmatprep.subr.mxu0 0.0
    %84 = vmatpush1.msra.mxu0 %v51
    %85 = vmatprep.subr.mxu0 0.0
    %86 = vmatpush1.msra.mxu0 %v50
    %87 = vmatprep.subr.mxu0 0.0
    %88 = vmatpush1.msra.mxu0 %v49
    %89 = vmatprep.subr.mxu0 0.0
    %90 = vmatpush1.msra.mxu0 %v48
    %91 = vmatprep.subr.mxu0 0.0
    %92 = vmatpush2.msra.mxu0 0.0
    %93 = vmatprep.subr.mxu0 0.0
    %94 = vmatpush2.msra.mxu0 0.0
    %95 = vmatprep.subr.mxu0 0.0
    %96 = vmatpush2.msra.mxu0 0.0
    %97 = vmatprep.subr.mxu0 0.0
    %98 = vmatpush2.msra.mxu0 0.0
    %99 = vmatprep.subr.mxu0 0.0
    %100 = vmatpush2.msra.mxu0 0.0
    %101 = vmatprep.subr.mxu0 0.0
    %102 = vmatpush2.msra.mxu0 0.0
    %103 = vmatprep.subr.mxu0 0.0
    %104 = vmatpush2.msra.mxu0 0.0
    %105 = vmatprep.subr.mxu0 0.0
    %106 = vmatpush2.msra.mxu0 0.0
    %107 = vmatprep.subr.mxu0 0.0
    %108 = vmatpush2.msra.mxu0 0.0
    %109 = vmatprep.subr.mxu0 0.0
    %110 = vmatpush2.msra.mxu0 0.0
    %111 = vmatprep.subr.mxu0 0.0
    %112 = vmatpush2.msra.mxu0 0.0
    %113 = vmatprep.subr.mxu0 0.0
    %114 = vmatpush2.msra.mxu0 0.0
    %115 = vmatprep.subr.mxu0 0.0
    %116 = vmatpush2.msra.mxu0 0.0
    %117 = vmatprep.subr.mxu0 0.0
    %118 = vmatpush2.msra.mxu0 0.0
    %119 = vmatprep.subr.mxu0 0.0
    %120 = vmatpush2.msra.mxu0 0.0
    %121 = vmatprep.subr.mxu0 0.0
    %122 = vmatpush2.msra.mxu0 0.0
    %123 = vmatprep.mubr.f32.mxu0 0.0
    %124 = vmatmul.mubr.f32.gmra.mxu0 %v54
    %v125 = vpop.f32.mrf.mxu0
    %v126 = vadd.f32 0.0, %v125
    %v127 = vpop.f32.mrf.mxu0
    %128 = vmatprep.mubr.f32.mxu0 0.0
    %129 = vmatmul.mubr.f32.gmra.mxu0 %v57
    %v130 = vpop.f32.mrf.mxu0
    %v131 = vadd.f32 0.0, %v130
    %v132 = vpop.f32.mrf.mxu0
    %133 = vdwg.mxu0
    %v134 = vmul.f32 %v126, %v126
    %v135 = vmul.f32 %v131, %v131
    %v136 = vld [vmem:[#allocation7] sm:$0xff]
    %v137 = vld [vmem:[#allocation7 + $0x8] sm:$0xff]
    %v138 = vld [vmem:[#allocation7 + $0x10] sm:$0xff]
    %v139 = vld [vmem:[#allocation7 + $0x18] sm:$0xff]
    %v141 = vsel %vm52, %v134, 0
    %v144 = vsel %vm52, %v135, 0
    %146 = vmatprep.subr.mxu0 0.0
    %147 = vmatpush1.msra.mxu0 0.0
    %148 = vmatprep.subr.mxu0 0.0
    %149 = vmatpush1.msra.mxu0 0.0
    %150 = vmatprep.subr.mxu0 0.0
    %151 = vmatpush1.msra.mxu0 0.0
    %152 = vmatprep.subr.mxu0 0.0
    %153 = vmatpush1.msra.mxu0 0.0
    %154 = vmatprep.subr.mxu0 0.0
    %155 = vmatpush1.msra.mxu0 0.0
    %156 = vmatprep.subr.mxu0 0.0
    %157 = vmatpush1.msra.mxu0 0.0
    %158 = vmatprep.subr.mxu0 0.0
    %159 = vmatpush1.msra.mxu0 0.0
    %160 = vmatprep.subr.mxu0 0.0
    %161 = vmatpush1.msra.mxu0 0.0
    %162 = vmatprep.subr.mxu0 0.0
    %163 = vmatpush1.msra.mxu0 0.0
    %164 = vmatprep.subr.mxu0 0.0
    %165 = vmatpush1.msra.mxu0 0.0
    %166 = vmatprep.subr.mxu0 0.0
    %167 = vmatpush1.msra.mxu0 0.0
    %168 = vmatprep.subr.mxu0 0.0
    %169 = vmatpush1.msra.mxu0 0.0
    %170 = vmatprep.subr.mxu0 0.0
    %171 = vmatpush1.msra.mxu0 %v139
    %172 = vmatprep.subr.mxu0 0.0
    %173 = vmatpush1.msra.mxu0 %v138
    %174 = vmatprep.subr.mxu0 0.0
    %175 = vmatpush1.msra.mxu0 %v137
    %176 = vmatprep.subr.mxu0 0.0
    %177 = vmatpush1.msra.mxu0 %v136
    %178 = vmatprep.subr.mxu0 0.0
    %179 = vmatpush2.msra.mxu0 0.0
    %180 = vmatprep.subr.mxu0 0.0
    %181 = vmatpush2.msra.mxu0 0.0
    %182 = vmatprep.subr.mxu0 0.0
    %183 = vmatpush2.msra.mxu0 0.0
    %184 = vmatprep.subr.mxu0 0.0
    %185 = vmatpush2.msra.mxu0 0.0
    %186 = vmatprep.subr.mxu0 0.0
    %187 = vmatpush2.msra.mxu0 0.0
    %188 = vmatprep.subr.mxu0 0.0
    %189 = vmatpush2.msra.mxu0 0.0
    %190 = vmatprep.subr.mxu0 0.0
    %191 = vmatpush2.msra.mxu0 0.0
    %192 = vmatprep.subr.mxu0 0.0
    %193 = vmatpush2.msra.mxu0 0.0
    %194 = vmatprep.subr.mxu0 0.0
    %195 = vmatpush2.msra.mxu0 0.0
    %196 = vmatprep.subr.mxu0 0.0
    %197 = vmatpush2.msra.mxu0 0.0
    %198 = vmatprep.subr.mxu0 0.0
    %199 = vmatpush2.msra.mxu0 0.0
    %200 = vmatprep.subr.mxu0 0.0
    %201 = vmatpush2.msra.mxu0 0.0
    %202 = vmatprep.subr.mxu0 0.0
    %203 = vmatpush2.msra.mxu0 0.0
    %204 = vmatprep.subr.mxu0 0.0
    %205 = vmatpush2.msra.mxu0 0.0
    %206 = vmatprep.subr.mxu0 0.0
    %207 = vmatpush2.msra.mxu0 0.0
    %208 = vmatprep.subr.mxu0 0.0
    %209 = vmatpush2.msra.mxu0 0.0
    %210 = vmatprep.mubr.f32.mxu0 0.0
    %211 = vmatmul.mubr.f32.gmra.mxu0 %v141
    %v212 = vpop.f32.mrf.mxu0
    %v213 = vadd.f32 0.0, %v212
    %v214 = vpop.f32.mrf.mxu0
    %215 = vmatprep.mubr.f32.mxu0 0.0
    %216 = vmatmul.mubr.f32.gmra.mxu0 %v144
    %v217 = vpop.f32.mrf.mxu0
    %v218 = vadd.f32 0.0, %v217
    %v219 = vpop.f32.mrf.mxu0
    %220 = vdwg.mxu0
    %v221 = vmul.f32 %v213, %v213
    %v222 = vmul.f32 %v218, %v218
    %v223 = vld [vmem:[%s2] sm:$0xff]
    %v224 = vld [vmem:[%s2 + $0x8] sm:$0xff]
    %v225 = vld [vmem:[%s2 + $0x10] sm:$0xff]
    %v226 = vld [vmem:[%s2 + $0x18] sm:$0xff]
    %v228 = vsel %vm52, %v221, 0
    %v231 = vsel %vm52, %v222, 0
    %233 = vmatprep.subr.mxu0 0.0
    %234 = vmatpush1.msra.mxu0 0.0
    %235 = vmatprep.subr.mxu0 0.0
    %236 = vmatpush1.msra.mxu0 0.0
    %237 = vmatprep.subr.mxu0 0.0
    %238 = vmatpush1.msra.mxu0 0.0
    %239 = vmatprep.subr.mxu0 0.0
    %240 = vmatpush1.msra.mxu0 0.0
    %241 = vmatprep.subr.mxu0 0.0
    %242 = vmatpush1.msra.mxu0 0.0
    %243 = vmatprep.subr.mxu0 0.0
    %244 = vmatpush1.msra.mxu0 0.0
    %245 = vmatprep.subr.mxu0 0.0
    %246 = vmatpush1.msra.mxu0 0.0
    %247 = vmatprep.subr.mxu0 0.0
    %248 = vmatpush1.msra.mxu0 0.0
    %249 = vmatprep.subr.mxu0 0.0
    %250 = vmatpush1.msra.mxu0 0.0
    %251 = vmatprep.subr.mxu0 0.0
    %252 = vmatpush1.msra.mxu0 0.0
    %253 = vmatprep.subr.mxu0 0.0
    %254 = vmatpush1.msra.mxu0 0.0
    %255 = vmatprep.subr.mxu0 0.0
    %256 = vmatpush1.msra.mxu0 0.0
    %257 = vmatprep.subr.mxu0 0.0
    %258 = vmatpush1.msra.mxu0 %v226
    %259 = vmatprep.subr.mxu0 0.0
    %260 = vmatpush1.msra.mxu0 %v225
    %261 = vmatprep.subr.mxu0 0.0
    %262 = vmatpush1.msra.mxu0 %v224
    %263 = vmatprep.subr.mxu0 0.0
    %264 = vmatpush1.msra.mxu0 %v223
    %265 = vmatprep.subr.mxu0 0.0
    %266 = vmatpush2.msra.mxu0 0.0
    %267 = vmatprep.subr.mxu0 0.0
    %268 = vmatpush2.msra.mxu0 0.0
    %269 = vmatprep.subr.mxu0 0.0
    %270 = vmatpush2.msra.mxu0 0.0
    %271 = vmatprep.subr.mxu0 0.0
    %272 = vmatpush2.msra.mxu0 0.0
    %273 = vmatprep.subr.mxu0 0.0
    %274 = vmatpush2.msra.mxu0 0.0
    %275 = vmatprep.subr.mxu0 0.0
    %276 = vmatpush2.msra.mxu0 0.0
    %277 = vmatprep.subr.mxu0 0.0
    %278 = vmatpush2.msra.mxu0 0.0
    %279 = vmatprep.subr.mxu0 0.0
    %280 = vmatpush2.msra.mxu0 0.0
    %281 = vmatprep.subr.mxu0 0.0
    %282 = vmatpush2.msra.mxu0 0.0
    %283 = vmatprep.subr.mxu0 0.0
    %284 = vmatpush2.msra.mxu0 0.0
    %285 = vmatprep.subr.mxu0 0.0
    %286 = vmatpush2.msra.mxu0 0.0
    %287 = vmatprep.subr.mxu0 0.0
    %288 = vmatpush2.msra.mxu0 0.0
    %289 = vmatprep.subr.mxu0 0.0
    %290 = vmatpush2.msra.mxu0 0.0
    %291 = vmatprep.subr.mxu0 0.0
    %292 = vmatpush2.msra.mxu0 0.0
    %293 = vmatprep.subr.mxu0 0.0
    %294 = vmatpush2.msra.mxu0 0.0
    %295 = vmatprep.subr.mxu0 0.0
    %296 = vmatpush2.msra.mxu0 0.0
    %297 = vmatprep.mubr.f32.mxu0 0.0
    %298 = vmatmul.mubr.f32.gmra.mxu0 %v228
    %v299 = vpop.f32.mrf.mxu0
    %v300 = vadd.f32 0.0, %v299
    %v301 = vpop.f32.mrf.mxu0
    %302 = vmatprep.mubr.f32.mxu0 0.0
    %303 = vmatmul.mubr.f32.gmra.mxu0 %v231
    %v304 = vpop.f32.mrf.mxu0
    %v305 = vadd.f32 0.0, %v304
    %v306 = vpop.f32.mrf.mxu0
    %307 = vdwg.mxu0
    %vm308 = vcmask 64512
    %309 = vst.msk [vmem:[%s5] sm:$0xff] %vm308, %v300
    %310 = vst.msk [vmem:[%s5 + $0x8] sm:$0xff] %vm308, %v305
    // Predicated region
    $region22: #{mlp_agent_forward.2} parent=1 // pred_check
      _
    $region23: #{mlp_agent_forward.2} parent=1 // pred_check_branch
      %312 = sbr.rel (0) target = $region25
    $region24: #{mlp_agent_forward.2} parent=1 // pred_region
      _
    $region25: #{mlp_agent_forward.2} parent=1 // pred_fallthru
      _
    // Predicated region
    $region26: #{mlp_agent_forward.2} parent=1 // pred_check
      _
    $region27: #{mlp_agent_forward.2} parent=1 // pred_check_branch
      %314 = sbr.rel (0) target = $region29
    $region28: #{mlp_agent_forward.2} parent=1 // pred_region
      _
    $region29: #{mlp_agent_forward.2} parent=1 // pred_fallthru
      _
    %315 = vsyncpa [#allocation8], 1

</llo_original>
